<compile_context>
chip_gen: v6e
topology: v6e:2x2x1
jax: 0.10.0
libtpu: 0.0.40
codegen_flags: <defaults>
</compile_context>

<pallas_src>
import jax
import jax.numpy as jnp
from jax import lax
from jax.experimental import pallas as pl
from jax.experimental.pallas import tpu as pltpu


def _round_up(v, m):
    return ((v + m - 1) // m) * m


def _make_conv1x1_kernel(cin, cout, tm, use_mxu, in_dtype):
    """Build a kernel specialized for static (cin, cout, tm)."""
    if use_mxu:
        # f32 inputs: multi-pass MXU (HIGHEST) for parity with an f32 reference;
        # bf16 inputs: single-pass MXU. Either way we accumulate in f32.
        precision = (lax.Precision.HIGHEST if in_dtype == jnp.float32
                     else lax.Precision.DEFAULT)

        def kernel(x_ref, w_ref, b_ref, o_ref):
            # x_ref: (1, Cin, tm)  w_ref: (Cout, Cin)  b_ref: (Cout, 1)
            acc = lax.dot_general(
                w_ref[...], x_ref[0],
                dimension_numbers=(((1,), (0,)), ((), ())),
                precision=precision,
                preferred_element_type=jnp.float32)
            acc = acc + b_ref[...].astype(jnp.float32)     # lane-broadcast bias
            o_ref[0] = acc.astype(o_ref.dtype)
    else:
        def kernel(x_ref, w_ref, b_ref, o_ref):
            # Tiny channel counts (Cin < 16 and Cin*Cout < 64): VPU broadcast-FMA.
            # Only one x row is live per unrolled step (no full-tile
            # materialization, so no vreg spills); w/b are hoisted once.
            w = w_ref[...].astype(jnp.float32)             # (Cout, Cin), tiny
            b = b_ref[...].astype(jnp.float32)             # (Cout, 1)
            acc = jnp.broadcast_to(b, (cout, tm))          # f32 accumulator
            for ic in range(cin):                          # static unroll, cin tiny
                x_row = x_ref[0, ic:ic + 1, :].astype(jnp.float32)   # (1, tm)
                acc = acc + w[:, ic:ic + 1] * x_row        # (Cout,1)*(1,tm)
            o_ref[0] = acc.astype(o_ref.dtype)
    return kernel


def outconv_forward(x_nchw, weight, bias, *, tm_target=4096):
    """1x1 conv (nn.Conv2d(in_ch, out_ch, 1)) forward.

    x_nchw: (N, Cin, H, W)
    weight: (Cout, Cin, 1, 1)   -- PyTorch Conv2d weight layout
    bias:   (Cout,)
    returns (N, Cout, H, W)
    """
    N, Cin, H, W = x_nchw.shape
    Cout = weight.shape[0]
    M = H * W
    itemsize = jnp.dtype(x_nchw.dtype).itemsize
    w_itemsize = jnp.dtype(weight.dtype).itemsize

    # Free reshapes only — no HBM transposes.
    x_flat = x_nchw.reshape(N, Cin, M)       # channels on sublanes, spatial on lanes
    w_mat = weight.reshape(Cout, Cin)        # matches PyTorch layout directly
    b_col = bias.reshape(Cout, 1)            # lane-broadcast bias column

    tm_target = max(128, (tm_target // 128) * 128)

    # --- tile-size selection -------------------------------------------------
    # Stream-buffer budget sized for v5e's 16 MiB default scoped VMEM
    # (v6e/v7x default to 32 MiB scoped, so this is always safe). Budget
    # assumes double-buffering on both the x and out streams.
    stream_budget = 6 * 1024 * 1024
    per_col_bytes = itemsize * (2 * Cin + 2 * Cout)
    max_tm = max(128, ((stream_budget // max(per_col_bytes, 1)) // 128) * 128)
    tm_cap = min(tm_target, max_tm)

    if M <= tm_cap:
        if N == 1 and M >= 256:
            # v7x has 2 TensorCores: guarantee >= 2 grid steps to shard over.
            tm = _round_up(pl.cdiv(M, 2), 128)
        else:
            tm = M                            # full extent: always a legal block
    else:
        # Near-equal lane-aligned tiles: no near-empty masked tail, balanced
        # megacore load on v7x, every store an unmasked vst.
        n_tiles = pl.cdiv(M, tm_cap)
        tm = _round_up(pl.cdiv(M, n_tiles), 128)
    grid_m = pl.cdiv(M, tm)

    # MXU for anything but the tiniest channel counts; always MXU for bf16.
    use_mxu = (Cin >= 16) or (Cin * Cout >= 64) or (x_nchw.dtype == jnp.bfloat16)
    kernel = _make_conv1x1_kernel(Cin, Cout, tm, use_mxu, x_nchw.dtype)

    # Deeper x buffering only pays on long grids of cheap tiles; at tm >= 1024
    # double-buffering already hides the DMA — keep the VMEM for larger tiles.
    x_buffer_count = 3 if (grid_m >= 4 and tm < 1024) else 2
    x_spec_kwargs = {}
    if x_buffer_count == 3:
        x_spec_kwargs["pipeline_mode"] = pl.Buffered(3)

    # Explicit VMEM budget that matches the actual pipelining (x_buffer_count
    # x-buffers + 2 out-buffers + resident weights/bias), with generous
    # headroom for Mosaic internal scratch. Safe on every chip (<= 30 MiB).
    vmem_need = ((x_buffer_count * Cin + 2 * Cout) * tm * itemsize
                 + (Cout * Cin + Cout) * w_itemsize)
    vmem_limit = int(min(max(2 * vmem_need + (4 << 20), 12 << 20), 30 << 20))

    # Advertise the (HBM-bound) cost so XLA can overlap neighbors around us.
    cost = pl.CostEstimate(
        flops=2 * N * Cout * Cin * M,
        transcendentals=0,
        bytes_accessed=(N * (Cin + Cout) * M) * itemsize
                       + (Cout * Cin + Cout) * w_itemsize)

    out_flat = pl.pallas_call(
        kernel,
        out_shape=jax.ShapeDtypeStruct((N, Cout, M), x_nchw.dtype),
        grid_spec=pltpu.PrefetchScalarGridSpec(
            num_scalar_prefetch=0,
            grid=(N, grid_m),
            in_specs=[
                pl.BlockSpec((1, Cin, tm), lambda n, m: (n, 0, m),
                             **x_spec_kwargs),                       # pixel tile
                pl.BlockSpec((Cout, Cin), lambda n, m: (0, 0)),      # resident weights
                pl.BlockSpec((Cout, 1), lambda n, m: (0, 0)),        # resident bias
            ],
            out_specs=pl.BlockSpec((1, Cout, tm), lambda n, m: (n, 0, m)),
        ),
        compiler_params=pltpu.CompilerParams(
            dimension_semantics=("parallel", "parallel"),
            vmem_limit_bytes=vmem_limit,
        ),
        cost_estimate=cost,
    )(x_flat, w_mat, b_col)

    return out_flat.reshape(N, Cout, H, W)


if __name__ == "__main__":
    key = jax.random.PRNGKey(0)
    k_x, k_w, k_b = jax.random.split(key, 3)

    # Small shapes consistent with the module: in_ch=4, out_ch=3
    N, Cin, H, W = 2, 4, 16, 16
    Cout = 3

    x = jax.random.normal(k_x, (N, Cin, H, W), dtype=jnp.float32)

    # Deterministic param init (mimics Conv2d kaiming-uniform bounds)
    fan_in = Cin * 1 * 1
    bound = 1.0 / (fan_in ** 0.5)
    weight = jax.random.uniform(k_w, (Cout, Cin, 1, 1),
                                minval=-bound, maxval=bound, dtype=jnp.float32)
    bias = jax.random.uniform(k_b, (Cout,),
                              minval=-bound, maxval=bound, dtype=jnp.float32)

    out = outconv_forward(x, weight, bias)
    jax.block_until_ready(out)

    # Sanity check against a pure-JAX reference (1x1 conv == channel matmul)
    ref = jnp.einsum("nchw,oc->nohw", x, weight.reshape(Cout, Cin)) \
          + bias.reshape(1, Cout, 1, 1)
    assert out.shape == (N, Cout, H, W)
    assert jnp.allclose(out, ref, atol=1e-5, rtol=1e-5)

    print("KERNEL_OK")
</pallas_src>

<mosaic_0001>
module attributes {stable_mosaic.version = 11 : i64} {
  func.func @kernel(%arg0: i32, %arg1: i32, %arg2: memref<1x4x256xf32, #tpu.memory_space<vmem>>, %arg3: memref<3x4xf32, #tpu.memory_space<vmem>>, %arg4: memref<3x1xf32, #tpu.memory_space<vmem>>, %arg5: memref<1x3x256xf32, #tpu.memory_space<vmem>>) attributes {dimension_semantics = [#tpu.dimension_semantics<parallel>, #tpu.dimension_semantics<parallel>], iteration_bounds = array<i64: 2, 1>, scalar_prefetch = 0 : i64, scratch_operands = 0 : i64, tpu.core_type = #tpu.core_type<tc>, window_params = [{transform_indices = @transform_0, window_bounds = array<i64: 1, 4, 256>}, {pipeline_mode = #tpu.pipeline_mode<synchronous>, transform_indices = @transform_1, window_bounds = array<i64: 3, 4>}, {pipeline_mode = #tpu.pipeline_mode<synchronous>, transform_indices = @transform_2, window_bounds = array<i64: 3, 1>}, {transform_indices = @transform_3, window_bounds = array<i64: 1, 3, 256>}]} {
    %c0 = arith.constant 0 : index
    %c0_0 = arith.constant 0 : index
    %0 = vector.load %arg3[%c0, %c0_0] : memref<3x4xf32, #tpu.memory_space<vmem>>, vector<3x4xf32>
    %c0_1 = arith.constant 0 : index
    %c0_2 = arith.constant 0 : index
    %1 = vector.load %arg4[%c0_1, %c0_2] : memref<3x1xf32, #tpu.memory_space<vmem>>, vector<3x1xf32>
    %2 = vector.shape_cast %1 : vector<3x1xf32> to vector<3x1xf32>
    %3 = vector.broadcast %2 : vector<3x1xf32> to vector<3x256xf32>
    %c0_3 = arith.constant 0 : index
    %c0_4 = arith.constant 0 : index
    %c0_5 = arith.constant 0 : index
    %4 = vector.load %arg2[%c0_3, %c0_4, %c0_5] : memref<1x4x256xf32, #tpu.memory_space<vmem>>, vector<1x1x256xf32>
    %5 = vector.shape_cast %4 : vector<1x1x256xf32> to vector<1x256xf32>
    %6 = vector.extract_strided_slice %0 {offsets = [0, 0], sizes = [3, 1], strides = [1, 1]} : vector<3x4xf32> to vector<3x1xf32>
    %7 = vector.broadcast %6 : vector<3x1xf32> to vector<3x256xf32>
    %8 = vector.broadcast %5 : vector<1x256xf32> to vector<3x256xf32>
    %9 = arith.mulf %7, %8 : vector<3x256xf32>
    %10 = arith.addf %3, %9 : vector<3x256xf32>
    %c0_6 = arith.constant 0 : index
    %c1 = arith.constant 1 : index
    %c0_7 = arith.constant 0 : index
    %11 = vector.load %arg2[%c0_6, %c1, %c0_7] : memref<1x4x256xf32, #tpu.memory_space<vmem>>, vector<1x1x256xf32>
    %12 = vector.shape_cast %11 : vector<1x1x256xf32> to vector<1x256xf32>
    %13 = vector.extract_strided_slice %0 {offsets = [0, 1], sizes = [3, 1], strides = [1, 1]} : vector<3x4xf32> to vector<3x1xf32>
    %14 = vector.broadcast %13 : vector<3x1xf32> to vector<3x256xf32>
    %15 = vector.broadcast %12 : vector<1x256xf32> to vector<3x256xf32>
    %16 = arith.mulf %14, %15 : vector<3x256xf32>
    %17 = arith.addf %10, %16 : vector<3x256xf32>
    %c0_8 = arith.constant 0 : index
    %c2 = arith.constant 2 : index
    %c0_9 = arith.constant 0 : index
    %18 = vector.load %arg2[%c0_8, %c2, %c0_9] : memref<1x4x256xf32, #tpu.memory_space<vmem>>, vector<1x1x256xf32>
    %19 = vector.shape_cast %18 : vector<1x1x256xf32> to vector<1x256xf32>
    %20 = vector.extract_strided_slice %0 {offsets = [0, 2], sizes = [3, 1], strides = [1, 1]} : vector<3x4xf32> to vector<3x1xf32>
    %21 = vector.broadcast %20 : vector<3x1xf32> to vector<3x256xf32>
    %22 = vector.broadcast %19 : vector<1x256xf32> to vector<3x256xf32>
    %23 = arith.mulf %21, %22 : vector<3x256xf32>
    %24 = arith.addf %17, %23 : vector<3x256xf32>
    %c0_10 = arith.constant 0 : index
    %c3 = arith.constant 3 : index
    %c0_11 = arith.constant 0 : index
    %25 = vector.load %arg2[%c0_10, %c3, %c0_11] : memref<1x4x256xf32, #tpu.memory_space<vmem>>, vector<1x1x256xf32>
    %26 = vector.shape_cast %25 : vector<1x1x256xf32> to vector<1x256xf32>
    %27 = vector.extract_strided_slice %0 {offsets = [0, 3], sizes = [3, 1], strides = [1, 1]} : vector<3x4xf32> to vector<3x1xf32>
    %28 = vector.broadcast %27 : vector<3x1xf32> to vector<3x256xf32>
    %29 = vector.broadcast %26 : vector<1x256xf32> to vector<3x256xf32>
    %30 = arith.mulf %28, %29 : vector<3x256xf32>
    %31 = arith.addf %24, %30 : vector<3x256xf32>
    %c0_12 = arith.constant 0 : index
    %c0_13 = arith.constant 0 : index
    %c0_14 = arith.constant 0 : index
    %32 = vector.load %arg5[%c0_12, %c0_13, %c0_14] : memref<1x3x256xf32, #tpu.memory_space<vmem>>, vector<1x3x256xf32>
    %33 = vector.shape_cast %32 : vector<1x3x256xf32> to vector<3x256xf32>
    %34 = vector.shape_cast %31 : vector<3x256xf32> to vector<1x3x256xf32>
    tpu.vector_store %arg5[%c0_12, %c0_13, %c0_14], %34 {strides = array<i32>} : memref<1x3x256xf32, #tpu.memory_space<vmem>>, vector<1x3x256xf32>,
    return
  }
  func.func @transform_0(%arg0: i32, %arg1: i32) -> (i32, i32, i32) {
    %c0_i32 = arith.constant 0 : i32
    %c0_i32_0 = arith.constant 0 : i32
    return %arg0, %c0_i32, %arg1 : i32, i32, i32
  }
  func.func @transform_1(%arg0: i32, %arg1: i32) -> (i32, i32) {
    %c0_i32 = arith.constant 0 : i32
    %c0_i32_0 = arith.constant 0 : i32
    %c0_i32_1 = arith.constant 0 : i32
    return %c0_i32, %c0_i32_0 : i32, i32
  }
  func.func @transform_2(%arg0: i32, %arg1: i32) -> (i32, i32) {
    %c0_i32 = arith.constant 0 : i32
    %c0_i32_0 = arith.constant 0 : i32
    %c0_i32_1 = arith.constant 0 : i32
    return %c0_i32, %c0_i32_0 : i32, i32
  }
  func.func @transform_3(%arg0: i32, %arg1: i32) -> (i32, i32, i32) {
    %c0_i32 = arith.constant 0 : i32
    %c0_i32_0 = arith.constant 0 : i32
    return %arg0, %c0_i32, %arg1 : i32, i32, i32
  }
}

</mosaic_0001>

<llo_original>
// kernel: tpu_custom_call.1
$region0: #{tpu_custom_call.1}
  #allocation0 [shape = 'u32[]', space=smem, size = 0x4, offset = 0x4, fixed_abs, tag = 'smem constant byte address 0x4 - core index']
  #allocation1 [shape = 'u32[144,128]{1,0:T(1,128)}', space=vmem, size = 0x12000, scoped, tag = 'internal scratch']
  %s0 = inlined_call_operand.hbm [shape: f32[2,4,256], index: 0, kind: input, shape index: {}]
  %s1 = inlined_call_operand.vmem [shape: f32[3,4], index: 1, kind: input, shape index: {}]
  %s2 = inlined_call_operand.vmem [shape: f32[3,1], index: 2, kind: input, shape index: {}]
  %s3 = inlined_call_operand.vmem [shape: f32[2,3,256], index: 3, kind: output, shape index: {}]
  %s4 = sld [smem:[#allocation0]]
  $region49: #{tpu_custom_call.1} parent=0
    _
  %s6 = ssub.s32 1, %s4
  %s7 = scalar_select 0, %s6, %s4
  $region1: #{tpu_custom_call.1} parent=0
    #allocation2 [shape = 'u8[8192]{0}', space=vmem, size = 0x2000, scoped, tag = 'input window, operand 0']
    #allocation3 [shape = 's32[2]{0}', space=sflag, size = 0x8, scoped, tag = 'scoped memory for tpu_custom_call.1']
    %8 = vsyncpa [#allocation3], 0
    %s9 = scalar_lea.sflag [#allocation3], 1
    %10 = vsyncpa %s9, 0
    loop: start=0, step=1, limit=4
    $region2: #{tpu_custom_call.1} parent=1 // loop_pre_header
      _
    $region3: #{tpu_custom_call.1} parent=1 // loop_header
      %s12 = sphi 0, %s16
      %p13 = scmp.ge.s32.totalorder %s12, 4
      %s19 = sphi 0, %s31
      %s20 = sphi 0, %s27
      %s21 = sphi 0, %s19
      %s22 = sphi 0, %s20
      %s23 = sphi 0, %s21
      %s24 = sphi 0, %s22
      %s36 = sphi 0, %s38
      %s39 = sphi 0, %s36
      %s40 = sphi 0, %s39
      %s56 = sphi 0, %s40
      %s60 = sphi 0, %s60
      %s62 = sphi 0, %s60
      %s63 = sphi 0, %s62
      %s77 = sphi 0, %s63
      %s81 = sphi 0, %s81
      %s83 = sphi 0, %s81
      %s84 = sphi 0, %s83
      %s98 = sphi 0, %s84
      %s106 = sphi 0, %s108
      %s109 = sphi 0, %s106
      %s110 = sphi 0, %s109
      %s126 = sphi 0, %s110
    $region4: #{tpu_custom_call.1} parent=1 // loop_header_branch
      %15 = sbr.rel (%p13) target = $region8
    $region5: #{tpu_custom_call.1} parent=1 // loop_body
      %s17 = ssub.s32 %s12, 1
      %s18 = ssub.s32 %s12, 2
      %s25 = sadd.s32 1, %s20
      %p26 = scmp.ge.s32.totalorder %s25, 1
      %s27 = scalar_select %p26, 0, %s25
      %s28 = sadd.s32 1, %s19
      %s29 = scalar_select %p26, %s28, %s19
      %p30 = scmp.ge.s32.totalorder %s29, 2
      %s31 = scalar_select %p30, 0, %s29
      %s32 = ssub.s32 %s19, %s31
      %s33 = ssub.s32 %s20, %s27
      %s34 = sor.u32 %s32, %s33
      %p35 = scmp.eq.s32.totalorder %s34, 0
      %s37 = sadd.s32 %s36, 1
      %s38 = scalar_select %p35, %s36, %s37
      %p41 = pneg %p35
      %p42 = scmp.eq.s32.totalorder %s12, 1
      %p43 = por %p41, %p42
      %p44 = scmp.ne.s32.totalorder %s36, %s39
      %p45 = scmp.eq.s32.totalorder %s12, 0
      %p46 = por %p44, %p45
      %p47 = scmp.ne.s32.totalorder %s36, %s39
      %p48 = scmp.eq.s32.totalorder %s17, 1
      %p49 = por %p47, %p48
      %p50 = scmp.ne.s32.totalorder %s39, %s40
      %p51 = scmp.eq.s32.totalorder %s17, 0
      %p52 = por %p50, %p51
      %p53 = scmp.ne.s32.totalorder %s39, %s40
      %p54 = scmp.eq.s32.totalorder %s18, 1
      %p55 = por %p53, %p54
      %p57 = scmp.ne.s32.totalorder %s40, %s56
      %p58 = scmp.eq.s32.totalorder %s18, 0
      %p59 = por %p57, %p58
      %s61 = sadd.s32 %s60, 1
      %p64 = scmp.eq.s32.totalorder %s12, 1
      %p65 = scmp.ne.s32.totalorder %s60, %s62
      %p66 = scmp.eq.s32.totalorder %s12, 0
      %p67 = por %p65, %p66
      %p68 = scmp.ne.s32.totalorder %s60, %s62
      %p69 = scmp.eq.s32.totalorder %s17, 1
      %p70 = por %p68, %p69
      %p71 = scmp.ne.s32.totalorder %s62, %s63
      %p72 = scmp.eq.s32.totalorder %s17, 0
      %p73 = por %p71, %p72
      %p74 = scmp.ne.s32.totalorder %s62, %s63
      %p75 = scmp.eq.s32.totalorder %s18, 1
      %p76 = por %p74, %p75
      %p78 = scmp.ne.s32.totalorder %s63, %s77
      %p79 = scmp.eq.s32.totalorder %s18, 0
      %p80 = por %p78, %p79
      %s82 = sadd.s32 %s81, 1
      %p85 = scmp.eq.s32.totalorder %s12, 1
      %p86 = scmp.ne.s32.totalorder %s81, %s83
      %p87 = scmp.eq.s32.totalorder %s12, 0
      %p88 = por %p86, %p87
      %p89 = scmp.ne.s32.totalorder %s81, %s83
      %p90 = scmp.eq.s32.totalorder %s17, 1
      %p91 = por %p89, %p90
      %p92 = scmp.ne.s32.totalorder %s83, %s84
      %p93 = scmp.eq.s32.totalorder %s17, 0
      %p94 = por %p92, %p93
      %p95 = scmp.ne.s32.totalorder %s83, %s84
      %p96 = scmp.eq.s32.totalorder %s18, 1
      %p97 = por %p95, %p96
      %p99 = scmp.ne.s32.totalorder %s84, %s98
      %p100 = scmp.eq.s32.totalorder %s18, 0
      %p101 = por %p99, %p100
      %s102 = ssub.s32 %s19, %s31
      %s103 = ssub.s32 %s20, %s27
      %s104 = sor.u32 %s102, %s103
      %p105 = scmp.eq.s32.totalorder %s104, 0
      %s107 = sadd.s32 %s106, 1
      %s108 = scalar_select %p105, %s106, %s107
      %p111 = pneg %p105
      %p112 = scmp.eq.s32.totalorder %s12, 1
      %p113 = por %p111, %p112
      %p114 = scmp.ne.s32.totalorder %s106, %s109
      %p115 = scmp.eq.s32.totalorder %s12, 0
      %p116 = por %p114, %p115
      %p117 = scmp.ne.s32.totalorder %s106, %s109
      %p118 = scmp.eq.s32.totalorder %s17, 1
      %p119 = por %p117, %p118
      %p120 = scmp.ne.s32.totalorder %s109, %s110
      %p121 = scmp.eq.s32.totalorder %s17, 0
      %p122 = por %p120, %p121
      %p123 = scmp.ne.s32.totalorder %s109, %s110
      %p124 = scmp.eq.s32.totalorder %s18, 1
      %p125 = por %p123, %p124
      %p127 = scmp.ne.s32.totalorder %s110, %s126
      %p128 = scmp.eq.s32.totalorder %s18, 0
      %p129 = por %p127, %p128
      %p130 = scmp.le.s32.totalorder 1, %s12
      %p131 = scmp.lt.s32.totalorder %s12, 3
      %p132 = pnand %p130, %p131
      %p133 = pneg %p132
      // Predicated region
      $region9: #{tpu_custom_call.1} parent=5 // pred_check
        _
      $region10: #{tpu_custom_call.1} parent=5 // pred_check_branch
        %135 = sbr.rel (%p132) target = $region12
      $region11: #{tpu_custom_call.1} parent=5 // pred_region
        %s136 = ssub.s32 %s12, 1
        // Predicated region
        $region13: #{tpu_custom_call.1} parent=11 // pred_check
          %p137 = pneg %p73
        $region14: #{tpu_custom_call.1} parent=11 // pred_check_branch
          %139 = sbr.rel (%p137) target = $region16
        $region15: #{tpu_custom_call.1} parent=11 // pred_region
          _
        $region16: #{tpu_custom_call.1} parent=11 // pred_fallthru
          _
        // Predicated region
        $region17: #{tpu_custom_call.1} parent=11 // pred_check
          %p140 = pneg %p94
        $region18: #{tpu_custom_call.1} parent=11 // pred_check_branch
          %142 = sbr.rel (%p140) target = $region20
        $region19: #{tpu_custom_call.1} parent=11 // pred_region
          _
        $region20: #{tpu_custom_call.1} parent=11 // pred_fallthru
          _
      $region12: #{tpu_custom_call.1} parent=5 // pred_fallthru
        _
      %p143 = scmp.lt.s32.totalorder %s12, 2
      // Predicated region
      $region21: #{tpu_custom_call.1} parent=5 // pred_check
        %p144 = pneg %p143
      $region22: #{tpu_custom_call.1} parent=5 // pred_check_branch
        %146 = sbr.rel (%p144) target = $region24
      $region23: #{tpu_custom_call.1} parent=5 // pred_region
        // Predicated region
        $region25: #{tpu_custom_call.1} parent=23 // pred_check
          %p147 = pneg %p46
        $region26: #{tpu_custom_call.1} parent=23 // pred_check_branch
          %149 = sbr.rel (%p147) target = $region28
        $region27: #{tpu_custom_call.1} parent=23 // pred_region
          %s150 = sand.u32 %s36, 1
          %s151 = scalar_lea.sflag [#allocation3], %s150
          %s152 = sand.u32 %s36, 1
          %s153 = smul.addr %s152, 8
          %s154 = scalar_lea.vmem [#allocation2], %s153
          %s155 = smul.u32 2, %s20
          %s157 = ssub.s32 128, 128
          %158 = vsyncadd %s151, %s157
          %s159 = smul.addr %s19, 2
          %s160 = sadd.s32 %s155, %s159
          %s161 = smul.addr %s160, 64
          %s162 = scalar_lea.hbm %s0, %s161
          %s164 = sshll.u32 %s154, 4
          %s165 = int_to_ptr.vmem [resolvable:$true] %s164
          %167 = dma.hbm_to_vmem [thread:$0]  %s162, 128, %s165, %s151
        $region28: #{tpu_custom_call.1} parent=23 // pred_fallthru
          _
      $region24: #{tpu_custom_call.1} parent=5 // pred_fallthru
        _
      %p168 = scmp.le.s32.totalorder 1, %s12
      %p169 = scmp.lt.s32.totalorder %s12, 3
      %p170 = pnand %p168, %p169
      %p171 = pneg %p170
      // Predicated region
      $region29: #{tpu_custom_call.1} parent=5 // pred_check
        _
      $region30: #{tpu_custom_call.1} parent=5 // pred_check_branch
        %173 = sbr.rel (%p170) target = $region32
      $region31: #{tpu_custom_call.1} parent=5 // pred_region
        %s174 = ssub.s32 %s12, 1
        %s175 = sand.u32 %s39, 1
        %s176 = scalar_lea.sflag [#allocation3], %s175
        %s177 = sand.u32 %s39, 1
        %s178 = smul.addr %s177, 8
        %s179 = scalar_lea.vmem [#allocation2], %s178
        // Predicated region
        $region33: #{tpu_custom_call.1} parent=31 // pred_check
          %p180 = pneg %p52
        $region34: #{tpu_custom_call.1} parent=31 // pred_check_branch
          %182 = sbr.rel (%p180) target = $region36
        $region35: #{tpu_custom_call.1} parent=31 // pred_region
          %183 = dma.done %s176, 128
        $region36: #{tpu_custom_call.1} parent=31 // pred_fallthru
          _
        %s184 = sand.u32 %s39, 1
        %s185 = scalar_lea.sflag [#allocation3], %s184
        %s186 = sand.u32 %s39, 1
        %s187 = smul.addr %s186, 8
        %s188 = scalar_lea.vmem [#allocation2], %s187
        %p189 = pneg %p52
        %p190 = pneg %p49
        %p191 = pneg %p73
        %p192 = pneg %p70
        %p193 = pneg %p94
        %p194 = pneg %p91
        %p195 = pneg %p122
        %p196 = pneg %p119
        %s197 = smul.u32 2, %s22
        %p198 = scmp.lt.s32.totalorder %s21, 1
        %s199 = scalar_select %p198, %s21, 1
        %p200 = scmp.lt.s32.totalorder %s197, 1
        %s201 = scalar_select %p200, %s197, 1
        %s202 = smul.addr %s199, 2
        %s203 = sadd.s32 %s201, %s202
        %s204 = smul.addr %s203, 4
        %s205 = scalar_lea.vmem %s3, %s204
        %s206 = smul.u32 2, %s22
        %s207 = smul.u32 2, %s22
        %p208 = scmp.lt.s32.totalorder %s21, 1
        %s209 = scalar_select %p208, %s21, 1
        %p210 = scmp.lt.s32.totalorder %s207, 1
        %s211 = scalar_select %p210, %s207, 1
        %s212 = smul.addr %s209, 2
        %s213 = sadd.s32 %s211, %s212
        %s214 = smul.addr %s213, 4
        %s215 = scalar_lea.vmem %s3, %s214
        %s216 = smul.u32 2, %s22
        %v217 = vld [vmem:[%s1] sm:$0x7]
        %v218 = vld [vmem:[%s2] sm:$0x7]
        %220 = vset.pattern.permute.xlu0 0
        %221 = vperm.xlu0 %220, %v218
        %v222 = vpop.permute.xlu0 %221
        %v224 = vld [vmem:[%s179] ss:$4 sm:$0x3]
        %226 = vset.pattern.permute.xlu0 0
        %227 = vperm.xlu0 %226, %v217
        %v228 = vpop.permute.xlu0 %227
        %v231 = vlaneseq
        %v232 = vshrl.u32 %v231, 7
        %v233 = vsub.s32 0, %v232
        %v234 = vrot.slane %v224, %v233
        %v235 = vlaneseq
        %v236 = vshrl.u32 %v235, 7
        %v237 = vsub.s32 1, %v236
        %v238 = vrot.slane %v224, %v237
        %v241 = vmul.f32 %v228, %v234
        %v242 = vmul.f32 %v228, %v238
        %v243 = vadd.f32 %v222, %v241
        %v244 = vadd.f32 %v222, %v242
        %s245 = scalar_lea.vmem %s179, 1 [#allocation2]
        %v246 = vld [vmem:[%s245] ss:$4 sm:$0x3]
        %247 = vset.pattern.permute.xlu0 1
        %248 = vperm.xlu0 %247, %v217
        %v249 = vpop.permute.xlu0 %248
        %v252 = vlaneseq
        %v253 = vshrl.u32 %v252, 7
        %v254 = vsub.s32 0, %v253
        %v255 = vrot.slane %v246, %v254
        %v256 = vlaneseq
        %v257 = vshrl.u32 %v256, 7
        %v258 = vsub.s32 1, %v257
        %v259 = vrot.slane %v246, %v258
        %v262 = vmul.f32 %v249, %v255
        %v263 = vmul.f32 %v249, %v259
        %v264 = vadd.f32 %v243, %v262
        %v265 = vadd.f32 %v244, %v263
        %s266 = scalar_lea.vmem %s179, 2 [#allocation2]
        %v267 = vld [vmem:[%s266] ss:$4 sm:$0x3]
        %268 = vset.pattern.permute.xlu0 2
        %269 = vperm.xlu0 %268, %v217
        %v270 = vpop.permute.xlu0 %269
        %v273 = vlaneseq
        %v274 = vshrl.u32 %v273, 7
        %v275 = vsub.s32 0, %v274
        %v276 = vrot.slane %v267, %v275
        %v277 = vlaneseq
        %v278 = vshrl.u32 %v277, 7
        %v279 = vsub.s32 1, %v278
        %v280 = vrot.slane %v267, %v279
        %v283 = vmul.f32 %v270, %v276
        %v284 = vmul.f32 %v270, %v280
        %v285 = vadd.f32 %v264, %v283
        %v286 = vadd.f32 %v265, %v284
        %s287 = scalar_lea.vmem %s179, 3 [#allocation2]
        %v288 = vld [vmem:[%s287] ss:$4 sm:$0x3]
        %289 = vset.pattern.permute.xlu0 3
        %290 = vperm.xlu0 %289, %v217
        %v291 = vpop.permute.xlu0 %290
        %v294 = vlaneseq
        %v295 = vshrl.u32 %v294, 7
        %v296 = vsub.s32 0, %v295
        %v297 = vrot.slane %v288, %v296
        %v298 = vlaneseq
        %v299 = vshrl.u32 %v298, 7
        %v300 = vsub.s32 1, %v299
        %v301 = vrot.slane %v288, %v300
        %v304 = vmul.f32 %v291, %v297
        %v305 = vmul.f32 %v291, %v301
        %v306 = vadd.f32 %v285, %v304
        %v307 = vadd.f32 %v286, %v305
        %v310 = vcombine.low %v306, %v307
        %312 = vst [vmem:[%s215] sm:$0x77] %v310
        %s313 = smul.u32 2, %s22
        %p314 = scmp.lt.s32.totalorder %s21, 1
        %s315 = scalar_select %p314, %s21, 1
        %p316 = scmp.lt.s32.totalorder %s313, 1
        %s317 = scalar_select %p316, %s313, 1
        %s318 = smul.addr %s315, 2
        %s319 = sadd.s32 %s317, %s318
        %s320 = smul.addr %s319, 4
        %s321 = scalar_lea.vmem %s3, %s320
        // Predicated region
        $region37: #{tpu_custom_call.1} parent=31 // pred_check
          %p322 = pneg %p119
        $region38: #{tpu_custom_call.1} parent=31 // pred_check_branch
          %324 = sbr.rel (%p322) target = $region40
        $region39: #{tpu_custom_call.1} parent=31 // pred_region
          %s325 = smul.u32 2, %s22
        $region40: #{tpu_custom_call.1} parent=31 // pred_fallthru
          _
      $region32: #{tpu_custom_call.1} parent=5 // pred_fallthru
        _
      %p326 = scmp.le.s32.totalorder 2, %s12
      // Predicated region
      $region41: #{tpu_custom_call.1} parent=5 // pred_check
        %p327 = pneg %p326
      $region42: #{tpu_custom_call.1} parent=5 // pred_check_branch
        %329 = sbr.rel (%p327) target = $region44
      $region43: #{tpu_custom_call.1} parent=5 // pred_region
        %s330 = ssub.s32 %s12, 2
        // Predicated region
        $region45: #{tpu_custom_call.1} parent=43 // pred_check
          %p331 = pneg %p125
        $region46: #{tpu_custom_call.1} parent=43 // pred_check_branch
          %333 = sbr.rel (%p331) target = $region48
        $region47: #{tpu_custom_call.1} parent=43 // pred_region
          %s334 = smul.u32 2, %s24
          %p335 = scmp.lt.s32.totalorder %s23, 1
          %s336 = scalar_select %p335, %s23, 1
          %p337 = scmp.lt.s32.totalorder %s334, 1
          %s338 = scalar_select %p337, %s334, 1
          %s339 = smul.addr %s336, 2
          %s340 = sadd.s32 %s338, %s339
          %s341 = smul.addr %s340, 4
          %s342 = scalar_lea.vmem %s3, %s341
        $region48: #{tpu_custom_call.1} parent=43 // pred_fallthru
          _
      $region44: #{tpu_custom_call.1} parent=5 // pred_fallthru
        _
    $region6: #{tpu_custom_call.1} parent=1 // loop_footer
      %s16 = sadd.s32 1, %s12
    $region7: #{tpu_custom_call.1} parent=1 // loop_footer_branch
      %11 = sbr.rel target = $region3
    $region8: #{tpu_custom_call.1} parent=1 // loop_exit
      _
    %343 = vsyncpa [#allocation3], 1
    %s344 = scalar_lea.sflag [#allocation3], 1
    %345 = vsyncpa %s344, 1

</llo_original>
